<compile_context>
chip_gen: v6e
topology: v6e:2x2x1
jax: 0.10.0
libtpu: 0.0.40
codegen_flags: <defaults>
</compile_context>

<pallas_src>
import functools

import jax
import jax.numpy as jnp
import numpy as np
from jax import lax
from jax.experimental import pallas as pl
from jax.experimental.pallas import tpu as pltpu


_TARGET_TILE_BYTES = 4 * 1024 * 1024   # per-input, per-pipeline-stage buffer
_VMEM_LIMIT_BYTES = 32 * 1024 * 1024   # 2 inputs x 2 bufs x 4 MiB = 16 MiB + slack


def _vae_loss_kernel(x_ref, xr_ref, mu_ref, sg_ref, out_ref, acc_ref, *,
                     tr, lanes, steps, n_full_rows, lane_rem, inv_n):
    p = pl.program_id(0)          # parallel slice (one per TensorCore on v7x)
    i = pl.program_id(1)          # streaming step within the slice
    last = steps - 1

    @pl.when(i == 0)
    def _init():
        acc_ref[...] = jnp.zeros_like(acc_ref)

    # Global starting row of this (unclamped) tile.  The index_map clamps the
    # actual DMA so fully-OOB steps still read valid memory; their
    # contribution is masked to zero below.
    row0 = (p * steps + i) * tr

    d = x_ref[...].astype(jnp.float32) - xr_ref[...].astype(jnp.float32)
    d2 = d * d

    def _accum(vals):
        if tr % 8 == 0:
            # Group sublane-row octets and add them: pure VALU work; the
            # cross-lane/sublane reduce is deferred to the finalize branch.
            acc_ref[...] += vals.reshape(tr // 8, 8, lanes).sum(axis=0)
        else:
            # Tiny single-tile case (tr == rows < 8): partial-sublane update.
            acc_ref[0:tr, :] += vals

    fully_valid = row0 + tr <= n_full_rows

    @pl.when(fully_valid)
    def _full_tile():
        _accum(d2)

    @pl.when(jnp.logical_not(fully_valid))
    def _ragged_tile():
        # Mask the squared term itself -- never rely on OOB garbage cancelling
        # in the subtraction.
        rid = row0 + lax.broadcasted_iota(jnp.int32, (tr, lanes), 0)
        if lane_rem:
            lid = lax.broadcasted_iota(jnp.int32, (tr, lanes), 1)
            mask = (rid < n_full_rows) | ((rid == n_full_rows) & (lid < lane_rem))
        else:
            mask = rid < n_full_rows
        _accum(jnp.where(mask, d2, 0.0))

    @pl.when(i == last)
    def _finalize():
        partial = jnp.sum(acc_ref[...]) * inv_n
        mu = mu_ref[...].astype(jnp.float32)
        sg = sg_ref[...].astype(jnp.float32)
        kl = -0.5 * jnp.sum(1.0 + sg - mu * mu - jnp.exp(sg))
        # The KL term is contributed exactly once (parallel slice 0 only).
        out_ref[...] = (partial + jnp.where(p == 0, kl, 0.0)).reshape(1, 1)


def vae_loss(x, x_, mu, sigma):
    """Pallas implementation of Loss.forward(x, x_, mu=mu, sigma=sigma)."""
    assert x.shape == x_.shape
    n_elems = int(np.prod(x.shape))

    # ---- lane-dense, copy-free slab layout -------------------------------
    lanes = None
    for cand in (512, 256, 128):
        if n_elems % cand == 0:
            lanes = cand
            break

    xf = x.reshape(-1)
    xrf = x_.reshape(-1)
    if lanes is None:
        # Rare ragged case (n_elems not a multiple of 128): one minimal pad.
        # Pad values are don't-care -- the kernel masks on the true n_elems.
        # TODO(synk): a fully copy-free path for this case would need a tiny
        # second pass (or manual DMA) for the <128-element tail.
        lanes = 128
        pad = (-n_elems) % lanes
        xf = jnp.pad(xf, (0, pad))
        xrf = jnp.pad(xrf, (0, pad))
    rows = xf.shape[0] // lanes
    x2 = xf.reshape(rows, lanes)
    xr2 = xrf.reshape(rows, lanes)

    # ---- dtype-aware tile sizing (~4 MiB per input buffer) ----------------
    itemsize = x.dtype.itemsize
    if rows >= 8:
        tr = min(_TARGET_TILE_BYTES // (lanes * itemsize), rows)
        tr = max(8, (tr // 8) * 8)        # multiple of 8, never exceeds rows
    else:
        tr = rows                         # full-dim block for tiny inputs

    total_steps = -(-rows // tr)
    num_slices = 2 if total_steps >= 2 else 1   # v7x: one slice per TensorCore
    steps = -(-total_steps // num_slices)
    max_block = total_steps - 1

    n_full_rows = n_elems // lanes
    lane_rem = n_elems % lanes

    def data_map(p, i):
        # Clamp so over-provisioned (fully OOB) steps DMA valid memory; their
        # contribution is masked away inside the kernel.
        return (jnp.minimum(p * steps + i, max_block), 0)

    kernel = functools.partial(
        _vae_loss_kernel,
        tr=tr, lanes=lanes, steps=steps,
        n_full_rows=n_full_rows, lane_rem=lane_rem, inv_n=1.0 / n_elems)

    partials = pl.pallas_call(
        kernel,
        out_shape=jax.ShapeDtypeStruct((num_slices, 1), jnp.float32),
        grid=(num_slices, steps),
        in_specs=[
            pl.BlockSpec((tr, lanes), data_map),
            pl.BlockSpec((tr, lanes), data_map),
            pl.BlockSpec(mu.shape, lambda p, i: (0,) * mu.ndim),      # tiny
            pl.BlockSpec(sigma.shape, lambda p, i: (0,) * sigma.ndim),
        ],
        out_specs=pl.BlockSpec((1, 1), lambda p, i: (p, 0)),
        scratch_shapes=[pltpu.VMEM((8, lanes), jnp.float32)],
        compiler_params=pltpu.CompilerParams(
            dimension_semantics=("parallel", "arbitrary"),
            vmem_limit_bytes=_VMEM_LIMIT_BYTES,
        ),
        cost_estimate=pl.CostEstimate(
            flops=3 * n_elems + 5 * int(np.prod(sigma.shape)),
            transcendentals=int(np.prod(sigma.shape)),
            bytes_accessed=2 * n_elems * itemsize
                           + int(np.prod(mu.shape)) * mu.dtype.itemsize
                           + int(np.prod(sigma.shape)) * sigma.dtype.itemsize),
    )(x2, xr2, mu, sigma)

    # Tiny cross-slice combine (at most 2 elements).
    return jnp.sum(partials)


def vae_loss_ref(x, x_, mu, sigma):
    """Plain-JAX reference matching the PyTorch module."""
    recon = jnp.mean((x.astype(jnp.float32) - x_.astype(jnp.float32)) ** 2)
    kl = -0.5 * jnp.sum(1.0 + sigma.astype(jnp.float32)
                        - mu.astype(jnp.float32) ** 2
                        - jnp.exp(sigma.astype(jnp.float32)))
    return recon + kl


if __name__ == "__main__":
    # Case 1: small VAE-ish shapes (single-tile, zero-copy, rows < 8 path).
    k1, k2, k3, k4 = jax.random.split(jax.random.PRNGKey(0), 4)
    N, C, H, W, Z = 2, 4, 16, 16, 32
    x = jax.random.normal(k1, (N, C, H, W), dtype=jnp.float32)
    x_recon = jax.random.normal(k2, (N, C, H, W), dtype=jnp.float32)
    mu = jax.random.normal(k3, (N, Z), dtype=jnp.float32)
    sigma = jax.random.normal(k4, (N, Z), dtype=jnp.float32) * 0.1

    loss = jax.block_until_ready(vae_loss(x, x_recon, mu, sigma))
    ref = jax.block_until_ready(vae_loss_ref(x, x_recon, mu, sigma))
    np.testing.assert_allclose(np.asarray(loss), np.asarray(ref),
                               rtol=1e-5, atol=1e-5)

    # Case 2: ragged element count (not a multiple of 128) -> exercises the
    # in-kernel lane/row masking (pad values are never trusted).
    k5, k6, k7, k8 = jax.random.split(jax.random.PRNGKey(1), 4)
    xb = jax.random.normal(k5, (2, 3, 15, 17), dtype=jnp.float32)
    xb_ = jax.random.normal(k6, (2, 3, 15, 17), dtype=jnp.float32)
    mub = jax.random.normal(k7, (2, 8), dtype=jnp.float32)
    sgb = jax.random.normal(k8, (2, 8), dtype=jnp.float32) * 0.1

    loss2 = jax.block_until_ready(vae_loss(xb, xb_, mub, sgb))
    ref2 = jax.block_until_ready(vae_loss_ref(xb, xb_, mub, sgb))
    np.testing.assert_allclose(np.asarray(loss2), np.asarray(ref2),
                               rtol=1e-5, atol=1e-4)

    # Case 3: larger input -> multi-step streaming reduction, 2-way parallel
    # split (both TensorCores on v7x), ragged last row-block masked in-kernel.
    k9, k10, k11, k12 = jax.random.split(jax.random.PRNGKey(2), 4)
    N3, C3, H3, W3, Z3 = 16, 8, 128, 200, 64
    xc = jax.random.normal(k9, (N3, C3, H3, W3), dtype=jnp.float32)
    xc_ = jax.random.normal(k10, (N3, C3, H3, W3), dtype=jnp.float32)
    muc = jax.random.normal(k11, (N3, Z3), dtype=jnp.float32)
    sgc = jax.random.normal(k12, (N3, Z3), dtype=jnp.float32) * 0.1

    loss3 = jax.block_until_ready(vae_loss(xc, xc_, muc, sgc))
    ref3 = jax.block_until_ready(vae_loss_ref(xc, xc_, muc, sgc))
    np.testing.assert_allclose(np.asarray(loss3), np.asarray(ref3),
                               rtol=1e-4, atol=1e-3)

    print("KERNEL_OK")
</pallas_src>

<mosaic_0001>
module attributes {stable_mosaic.version = 11 : i64} {
  func.func @_vae_loss_kernel(%arg0: i32, %arg1: i32, %arg2: memref<4x512xf32, #tpu.memory_space<vmem>>, %arg3: memref<4x512xf32, #tpu.memory_space<vmem>>, %arg4: memref<2x32xf32, #tpu.memory_space<vmem>>, %arg5: memref<2x32xf32, #tpu.memory_space<vmem>>, %arg6: memref<1x1xf32, #tpu.memory_space<vmem>>, %arg7: memref<8x512xf32, #tpu.memory_space<vmem>>) attributes {dimension_semantics = [#tpu.dimension_semantics<parallel>, #tpu.dimension_semantics<arbitrary>], iteration_bounds = array<i64: 1, 1>, scalar_prefetch = 0 : i64, scratch_operands = 1 : i64, tpu.core_type = #tpu.core_type<tc>, window_params = [{transform_indices = @transform_0, window_bounds = array<i64: 4, 512>}, {transform_indices = @transform_1, window_bounds = array<i64: 4, 512>}, {pipeline_mode = #tpu.pipeline_mode<synchronous>, transform_indices = @transform_2, window_bounds = array<i64: 2, 32>}, {pipeline_mode = #tpu.pipeline_mode<synchronous>, transform_indices = @transform_3, window_bounds = array<i64: 2, 32>}, {transform_indices = @transform_4, window_bounds = array<i64: 1, 1>}]} {
    %c0_i32 = arith.constant 0 : i32
    %0 = arith.cmpi eq, %arg1, %c0_i32 : i32
    %1 = arith.extui %0 : i1 to i32
    %c0_i32_0 = arith.constant 0 : i32
    %2 = arith.cmpi ne, %1, %c0_i32_0 : i32
    scf.if %2 {
      %cst = arith.constant 0.000000e+00 : f32
      %20 = vector.broadcast %cst : f32 to vector<8x512xf32>
      %c0_10 = arith.constant 0 : index
      %c0_11 = arith.constant 0 : index
      %21 = vector.load %arg7[%c0_10, %c0_11] : memref<8x512xf32, #tpu.memory_space<vmem>>, vector<8x512xf32>
      tpu.vector_store %arg7[%c0_10, %c0_11], %20 {strides = array<i32>} : memref<8x512xf32, #tpu.memory_space<vmem>>, vector<8x512xf32>,
    } else {
    }
    %c1_i32 = arith.constant 1 : i32
    %3 = arith.muli %arg0, %c1_i32 : i32
    %4 = arith.addi %3, %arg1 : i32
    %c4_i32 = arith.constant 4 : i32
    %5 = arith.muli %4, %c4_i32 : i32
    %c0 = arith.constant 0 : index
    %c0_1 = arith.constant 0 : index
    %6 = vector.load %arg2[%c0, %c0_1] : memref<4x512xf32, #tpu.memory_space<vmem>>, vector<4x512xf32>
    %c0_2 = arith.constant 0 : index
    %c0_3 = arith.constant 0 : index
    %7 = vector.load %arg3[%c0_2, %c0_3] : memref<4x512xf32, #tpu.memory_space<vmem>>, vector<4x512xf32>
    %8 = arith.subf %6, %7 : vector<4x512xf32>
    %9 = arith.mulf %8, %8 : vector<4x512xf32>
    %c4_i32_4 = arith.constant 4 : i32
    %10 = arith.addi %5, %c4_i32_4 : i32
    %c4_i32_5 = arith.constant 4 : i32
    %11 = arith.cmpi sle, %10, %c4_i32_5 : i32
    %12 = arith.extui %11 : i1 to i32
    %c0_i32_6 = arith.constant 0 : i32
    %13 = arith.cmpi ne, %12, %c0_i32_6 : i32
    scf.if %13 {
      %c0_10 = arith.constant 0 : index
      %c0_11 = arith.constant 0 : index
      %20 = vector.load %arg7[%c0_10, %c0_11] : memref<8x512xf32, #tpu.memory_space<vmem>>, vector<4x512xf32>
      %21 = arith.addf %20, %9 : vector<4x512xf32>
      %c0_12 = arith.constant 0 : index
      %c0_13 = arith.constant 0 : index
      %22 = vector.load %arg7[%c0_12, %c0_13] : memref<8x512xf32, #tpu.memory_space<vmem>>, vector<4x512xf32>
      tpu.vector_store %arg7[%c0_12, %c0_13], %21 {strides = array<i32>} : memref<8x512xf32, #tpu.memory_space<vmem>>, vector<4x512xf32>,
    } else {
    }
    %true = arith.constant true
    %14 = arith.xori %11, %true : i1
    %15 = arith.extui %14 : i1 to i32
    %c0_i32_7 = arith.constant 0 : i32
    %16 = arith.cmpi ne, %15, %c0_i32_7 : i32
    scf.if %16 {
      %20 = tpu.iota {dimensions = array<i32: 0>} : vector<4x512xi32>
      %21 = vector.broadcast %5 : i32 to vector<4x512xi32>
      %22 = arith.addi %21, %20 : vector<4x512xi32>
      %c4_i32_10 = arith.constant 4 : i32
      %23 = vector.broadcast %c4_i32_10 : i32 to vector<4x512xi32>
      %24 = arith.cmpi slt, %22, %23 : vector<4x512xi32>
      %cst = arith.constant 0.000000e+00 : f32
      %25 = vector.broadcast %cst : f32 to vector<4x512xf32>
      %26 = arith.select %24, %9, %25 : vector<4x512xi1>, vector<4x512xf32>
      %c0_11 = arith.constant 0 : index
      %c0_12 = arith.constant 0 : index
      %27 = vector.load %arg7[%c0_11, %c0_12] : memref<8x512xf32, #tpu.memory_space<vmem>>, vector<4x512xf32>
      %28 = arith.addf %27, %26 : vector<4x512xf32>
      %c0_13 = arith.constant 0 : index
      %c0_14 = arith.constant 0 : index
      %29 = vector.load %arg7[%c0_13, %c0_14] : memref<8x512xf32, #tpu.memory_space<vmem>>, vector<4x512xf32>
      tpu.vector_store %arg7[%c0_13, %c0_14], %28 {strides = array<i32>} : memref<8x512xf32, #tpu.memory_space<vmem>>, vector<4x512xf32>,
    } else {
    }
    %c0_i32_8 = arith.constant 0 : i32
    %17 = arith.cmpi eq, %arg1, %c0_i32_8 : i32
    %18 = arith.extui %17 : i1 to i32
    %c0_i32_9 = arith.constant 0 : i32
    %19 = arith.cmpi ne, %18, %c0_i32_9 : i32
    scf.if %19 {
      %c0_10 = arith.constant 0 : index
      %c0_11 = arith.constant 0 : index
      %20 = vector.load %arg7[%c0_10, %c0_11] : memref<8x512xf32, #tpu.memory_space<vmem>>, vector<8x512xf32>
      %21 = vector.shape_cast %20 : vector<8x512xf32> to vector<1x8x512xf32>
      %cst = arith.constant dense<0.000000e+00> : vector<1xf32>
      %22 = vector.multi_reduction <add>, %21, %cst [1, 2] : vector<1x8x512xf32> to vector<1xf32>
      %23 = vector.shape_cast %22 : vector<1xf32> to vector<1x1x1xf32>
      %24 = vector.extract %23[0, 0, 0] : f32 from vector<1x1x1xf32>
      %cst_12 = arith.constant 4.8828125E-4 : f32
      %25 = arith.mulf %24, %cst_12 : f32
      %c0_13 = arith.constant 0 : index
      %c0_14 = arith.constant 0 : index
      %26 = vector.load %arg4[%c0_13, %c0_14] : memref<2x32xf32, #tpu.memory_space<vmem>>, vector<2x32xf32>
      %c0_15 = arith.constant 0 : index
      %c0_16 = arith.constant 0 : index
      %27 = vector.load %arg5[%c0_15, %c0_16] : memref<2x32xf32, #tpu.memory_space<vmem>>, vector<2x32xf32>
      %cst_17 = arith.constant 1.000000e+00 : f32
      %28 = vector.broadcast %cst_17 : f32 to vector<2x32xf32>
      %29 = arith.addf %28, %27 : vector<2x32xf32>
      %30 = arith.mulf %26, %26 : vector<2x32xf32>
      %31 = arith.subf %29, %30 : vector<2x32xf32>
      %32 = math.exp %27 : vector<2x32xf32>
      %33 = arith.subf %31, %32 : vector<2x32xf32>
      %34 = vector.shape_cast %33 : vector<2x32xf32> to vector<1x2x32xf32>
      %cst_18 = arith.constant dense<0.000000e+00> : vector<1xf32>
      %35 = vector.multi_reduction <add>, %34, %cst_18 [1, 2] : vector<1x2x32xf32> to vector<1xf32>
      %36 = vector.shape_cast %35 : vector<1xf32> to vector<1x1x1xf32>
      %37 = vector.extract %36[0, 0, 0] : f32 from vector<1x1x1xf32>
      %cst_19 = arith.constant -5.000000e-01 : f32
      %38 = arith.mulf %cst_19, %37 : f32
      %c0_i32_20 = arith.constant 0 : i32
      %39 = arith.cmpi eq, %arg0, %c0_i32_20 : i32
      %cst_21 = arith.constant 0.000000e+00 : f32
      %40 = arith.select %39, %38, %cst_21 : f32
      %41 = arith.addf %25, %40 : f32
      %42 = vector.broadcast %41 : f32 to vector<1x1xf32>
      %c0_22 = arith.constant 0 : index
      %c0_23 = arith.constant 0 : index
      %43 = vector.load %arg6[%c0_22, %c0_23] : memref<1x1xf32, #tpu.memory_space<vmem>>, vector<1x1xf32>
      tpu.vector_store %arg6[%c0_22, %c0_23], %42 {strides = array<i32>} : memref<1x1xf32, #tpu.memory_space<vmem>>, vector<1x1xf32>,
    } else {
    }
    return
  }
  func.func @transform_0(%arg0: i32, %arg1: i32) -> (i32, i32) {
    %c1_i32 = arith.constant 1 : i32
    %0 = arith.muli %arg0, %c1_i32 : i32
    %1 = arith.addi %0, %arg1 : i32
    %c0_i32 = arith.constant 0 : i32
    %2 = arith.minsi %1, %c0_i32 : i32
    %c0_i32_0 = arith.constant 0 : i32
    %c0_i32_1 = arith.constant 0 : i32
    return %2, %c0_i32_0 : i32, i32
  }
  func.func @transform_1(%arg0: i32, %arg1: i32) -> (i32, i32) {
    %c1_i32 = arith.constant 1 : i32
    %0 = arith.muli %arg0, %c1_i32 : i32
    %1 = arith.addi %0, %arg1 : i32
    %c0_i32 = arith.constant 0 : i32
    %2 = arith.minsi %1, %c0_i32 : i32
    %c0_i32_0 = arith.constant 0 : i32
    %c0_i32_1 = arith.constant 0 : i32
    return %2, %c0_i32_0 : i32, i32
  }
  func.func @transform_2(%arg0: i32, %arg1: i32) -> (i32, i32) {
    %c0_i32 = arith.constant 0 : i32
    %c0_i32_0 = arith.constant 0 : i32
    %c0_i32_1 = arith.constant 0 : i32
    return %c0_i32, %c0_i32_0 : i32, i32
  }
  func.func @transform_3(%arg0: i32, %arg1: i32) -> (i32, i32) {
    %c0_i32 = arith.constant 0 : i32
    %c0_i32_0 = arith.constant 0 : i32
    %c0_i32_1 = arith.constant 0 : i32
    return %c0_i32, %c0_i32_0 : i32, i32
  }
  func.func @transform_4(%arg0: i32, %arg1: i32) -> (i32, i32) {
    %c0_i32 = arith.constant 0 : i32
    %c0_i32_0 = arith.constant 0 : i32
    return %arg0, %c0_i32 : i32, i32
  }
}

</mosaic_0001>

<llo_original>
// kernel: tpu_custom_call.1
$region0: #{tpu_custom_call.1}
  #allocation0 [shape = 'u32[]', space=smem, size = 0x4, offset = 0x4, fixed_abs, tag = 'smem constant byte address 0x4 - core index']
  #allocation1 [shape = 'u32[144,128]{1,0:T(1,128)}', space=vmem, size = 0x12000, scoped, tag = 'internal scratch']
  #allocation2 [shape = 'f32[8,512]{1,0:T(8,128)}', space=vmem, size = 0x4000, scoped, tag = 'scratch operand']
  %s0 = inlined_call_operand.hbm [shape: f32[4,512], index: 0, kind: input, shape index: {}]
  %s1 = inlined_call_operand.hbm [shape: f32[4,512], index: 1, kind: input, shape index: {}]
  %s2 = inlined_call_operand.vmem [shape: f32[2,32], index: 2, kind: input, shape index: {}]
  %s3 = inlined_call_operand.vmem [shape: f32[2,32], index: 3, kind: input, shape index: {}]
  %s4 = inlined_call_operand.hbm [shape: f32[1,1], index: 4, kind: output, shape index: {}]
  %s5 = sld [smem:[#allocation0]]
  $region50: #{tpu_custom_call.1} parent=0
    _
  %s7 = ssub.s32 1, %s5
  %s8 = scalar_select 0, %s7, %s5
  $region1: #{tpu_custom_call.1} parent=0
    #allocation3 [shape = 'u8[8192]{0}', space=vmem, size = 0x2000, scoped, tag = 'input window, operand 0, single buffered']
    #allocation4 [shape = 's32[1]{0}', space=sflag, size = 0x4, scoped, tag = 'scoped memory for tpu_custom_call.1']
    #allocation5 [shape = 's32[1]{0}', space=sflag, size = 0x4, scoped, tag = 'scoped memory for tpu_custom_call.1']
    #allocation6 [shape = 'u8[8192]{0}', space=vmem, size = 0x2000, scoped, tag = 'input window, operand 1, single buffered']
    #allocation7 [shape = 's32[1]{0}', space=sflag, size = 0x4, scoped, tag = 'scoped memory for tpu_custom_call.1']
    #allocation8 [shape = 'u8[512]{0}', space=vmem, size = 0x400, scoped, tag = 'output window, operand 0, single buffered']
    %9 = vsyncpa [#allocation4], 0
    %10 = vsyncpa [#allocation7], 0
    %11 = vsyncpa [#allocation5], 0
    // Predicated region
    $region2: #{tpu_custom_call.1} parent=1 // pred_check
      _
    $region3: #{tpu_custom_call.1} parent=1 // pred_check_branch
      %13 = sbr.rel (0) target = $region5
    $region4: #{tpu_custom_call.1} parent=1 // pred_region
      %s14 = sadd.s32 0, 0
      %p15 = scmp.lt.s32.totalorder %s14, 0
      %s16 = scalar_select %p15, %s14, 0
      %s18 = ssub.s32 256, 256
      %19 = vsyncadd [#allocation4], %s18
      %s20 = smul.addr %s16, 4
      %s21 = smul.addr %s20, 64
      %s22 = scalar_lea.hbm %s0, %s21
      %s24 = sshll.u32 [#allocation3], 4
      %s25 = int_to_ptr.vmem [resolvable:$true] %s24
      %27 = dma.hbm_to_vmem [thread:$0]  %s22, 256, %s25, [#allocation4]
    $region5: #{tpu_custom_call.1} parent=1 // pred_fallthru
      _
    // Predicated region
    $region6: #{tpu_custom_call.1} parent=1 // pred_check
      _
    $region7: #{tpu_custom_call.1} parent=1 // pred_check_branch
      %29 = sbr.rel (0) target = $region9
    $region8: #{tpu_custom_call.1} parent=1 // pred_region
      %s30 = sadd.s32 0, 0
      %p31 = scmp.lt.s32.totalorder %s30, 0
      %s32 = scalar_select %p31, %s30, 0
      %s34 = ssub.s32 256, 256
      %35 = vsyncadd [#allocation7], %s34
      %s36 = smul.addr %s32, 4
      %s37 = smul.addr %s36, 64
      %s38 = scalar_lea.hbm %s1, %s37
      %s40 = sshll.u32 [#allocation6], 4
      %s41 = int_to_ptr.vmem [resolvable:$true] %s40
      %43 = dma.hbm_to_vmem [thread:$0]  %s38, 256, %s41, [#allocation7]
    $region9: #{tpu_custom_call.1} parent=1 // pred_fallthru
      _
    // Predicated region
    $region10: #{tpu_custom_call.1} parent=1 // pred_check
      _
    $region11: #{tpu_custom_call.1} parent=1 // pred_check_branch
      %45 = sbr.rel (0) target = $region13
    $region12: #{tpu_custom_call.1} parent=1 // pred_region
      _
    $region13: #{tpu_custom_call.1} parent=1 // pred_fallthru
      _
    // Predicated region
    $region14: #{tpu_custom_call.1} parent=1 // pred_check
      _
    $region15: #{tpu_custom_call.1} parent=1 // pred_check_branch
      %47 = sbr.rel (0) target = $region17
    $region16: #{tpu_custom_call.1} parent=1 // pred_region
      _
    $region17: #{tpu_custom_call.1} parent=1 // pred_fallthru
      _
    // Predicated region
    $region18: #{tpu_custom_call.1} parent=1 // pred_check
      _
    $region19: #{tpu_custom_call.1} parent=1 // pred_check_branch
      %49 = sbr.rel (0) target = $region21
    $region20: #{tpu_custom_call.1} parent=1 // pred_region
      %50 = dma.done [#allocation4], 256
    $region21: #{tpu_custom_call.1} parent=1 // pred_fallthru
      _
    // Predicated region
    $region22: #{tpu_custom_call.1} parent=1 // pred_check
      _
    $region23: #{tpu_custom_call.1} parent=1 // pred_check_branch
      %52 = sbr.rel (0) target = $region25
    $region24: #{tpu_custom_call.1} parent=1 // pred_region
      %53 = dma.done [#allocation7], 256
    $region25: #{tpu_custom_call.1} parent=1 // pred_fallthru
      _
    %s54 = sadd.s32 0, 0
    %p55 = scmp.lt.s32.totalorder %s54, 0
    %s56 = scalar_select %p55, %s54, 0
    %s57 = sadd.s32 0, 0
    %p58 = scmp.lt.s32.totalorder %s57, 0
    %s59 = scalar_select %p58, %s57, 0
    %p60 = scmp.eq.s32.totalorder 0, 0
    // Predicated region
    $region26: #{tpu_custom_call.1} parent=1 // pred_check
      %p61 = pneg %p60
    $region27: #{tpu_custom_call.1} parent=1 // pred_check_branch
      %63 = sbr.rel (%p61) target = $region29
    $region28: #{tpu_custom_call.1} parent=1 // pred_region
      %64 = vst [vmem:[#allocation2] sm:$0xff] 0.0
      %65 = vst [vmem:[#allocation2 + $0x8] sm:$0xff] 0.0
      %66 = vst [vmem:[#allocation2 + $0x10] sm:$0xff] 0.0
      %67 = vst [vmem:[#allocation2 + $0x18] sm:$0xff] 0.0
    $region29: #{tpu_custom_call.1} parent=1 // pred_fallthru
      _
    %s68 = sadd.s32 0, 0
    %s69 = smul.u32 %s68, 4
    %v70 = vld [vmem:[#allocation3] sm:$0xff]
    %v71 = vld [vmem:[#allocation3 + $0x8] sm:$0xff]
    %v72 = vld [vmem:[#allocation6] sm:$0xff]
    %v73 = vld [vmem:[#allocation6 + $0x8] sm:$0xff]
    %v74 = vsub.f32 %v70, %v72
    %v75 = vsub.f32 %v71, %v73
    %v76 = vmul.f32 %v74, %v74
    %v77 = vmul.f32 %v75, %v75
    %s78 = sadd.s32 %s69, 4
    %p79 = scmp.le.s32.totalorder %s78, 4
    // Predicated region
    $region30: #{tpu_custom_call.1} parent=1 // pred_check
      %p80 = pneg %p79
    $region31: #{tpu_custom_call.1} parent=1 // pred_check_branch
      %82 = sbr.rel (%p80) target = $region33
    $region32: #{tpu_custom_call.1} parent=1 // pred_region
      %v83 = vld [vmem:[#allocation2] sm:$0xf]
      %v84 = vld [vmem:[#allocation2 + $0x8] sm:$0xf]
      %v85 = vld [vmem:[#allocation2 + $0x10] sm:$0xf]
      %v86 = vld [vmem:[#allocation2 + $0x18] sm:$0xf]
      %v89 = vcombine.high %v76, %v76
      %v90 = vcombine.high %v77, %v77
      %v93 = vadd.f32 %v83, %v76
      %v94 = vadd.f32 %v84, %v89
      %v95 = vadd.f32 %v85, %v77
      %v96 = vadd.f32 %v86, %v90
      %97 = vst [vmem:[#allocation2] sm:$0xf] %v93
      %98 = vst [vmem:[#allocation2 + $0x8] sm:$0xf] %v94
      %99 = vst [vmem:[#allocation2 + $0x10] sm:$0xf] %v95
      %100 = vst [vmem:[#allocation2 + $0x18] sm:$0xf] %v96
    $region33: #{tpu_custom_call.1} parent=1 // pred_fallthru
      _
    %p101 = scmp.gt.s32.totalorder %s78, 4
    // Predicated region
    $region34: #{tpu_custom_call.1} parent=1 // pred_check
      %p102 = pneg %p101
    $region35: #{tpu_custom_call.1} parent=1 // pred_check_branch
      %104 = sbr.rel (%p102) target = $region37
    $region36: #{tpu_custom_call.1} parent=1 // pred_region
      %v105 = vlaneseq
      %v106 = vshrl.u32 %v105, 7
      %v107 = vstv %s69
      %v108 = vadd.s32 %v107, %v106
      %vm109 = vcmp.lt.s32.totalorder %v108, 4
      %v112 = vcombine.high %v76, %v76
      %v113 = vcombine.high %v77, %v77
      %v116 = vsel %vm109, %v76, 0.0
      %v117 = vsel %vm109, %v112, 0.0
      %v118 = vsel %vm109, %v77, 0.0
      %v119 = vsel %vm109, %v113, 0.0
      %v120 = vld [vmem:[#allocation2] sm:$0xf]
      %v121 = vld [vmem:[#allocation2 + $0x8] sm:$0xf]
      %v122 = vld [vmem:[#allocation2 + $0x10] sm:$0xf]
      %v123 = vld [vmem:[#allocation2 + $0x18] sm:$0xf]
      %v124 = vadd.f32 %v120, %v116
      %v125 = vadd.f32 %v121, %v117
      %v126 = vadd.f32 %v122, %v118
      %v127 = vadd.f32 %v123, %v119
      %128 = vst [vmem:[#allocation2] sm:$0xf] %v124
      %129 = vst [vmem:[#allocation2 + $0x8] sm:$0xf] %v125
      %130 = vst [vmem:[#allocation2 + $0x10] sm:$0xf] %v126
      %131 = vst [vmem:[#allocation2 + $0x18] sm:$0xf] %v127
    $region37: #{tpu_custom_call.1} parent=1 // pred_fallthru
      _
    // Predicated region
    $region38: #{tpu_custom_call.1} parent=1 // pred_check
      %p132 = pneg %p60
    $region39: #{tpu_custom_call.1} parent=1 // pred_check_branch
      %134 = sbr.rel (%p132) target = $region41
    $region40: #{tpu_custom_call.1} parent=1 // pred_region
      %v135 = vld [vmem:[#allocation2] sm:$0xff]
      %v136 = vld [vmem:[#allocation2 + $0x8] sm:$0xff]
      %v137 = vld [vmem:[#allocation2 + $0x10] sm:$0xff]
      %v138 = vld [vmem:[#allocation2 + $0x18] sm:$0xff]
      %v139 = vadd.f32 %v135, %v136
      %v140 = vadd.f32 %v139, %v137
      %v141 = vadd.f32 %v140, %v138
      %142 = vadd.xlane.f32.xlu0 %v141
      %v143 = vpop.xlane.xlu0 %142
      %v144 = vrot.slane %v143, 4
      %v145 = vadd.f32 %v143, %v144
      %v146 = vrot.slane %v145, 2
      %v147 = vadd.f32 %v145, %v146
      %v148 = vrot.slane %v147, 1
      %v149 = vadd.f32 %v147, %v148
      %s150 = vtos %v149
      %s151 = smul.f32 %s150, 0.00048828125
      %v152 = vld [vmem:[%s2] sm:$0x3]
      %v153 = vld [vmem:[%s3] sm:$0x3]
      %v154 = vadd.f32 %v153, 1.0
      %v155 = vmul.f32 %v152, %v152
      %v156 = vsub.f32 %v154, %v155
      %v157 = vmul.f32 %v153, 1.442695
      %v158 = vpow.pop %v157
      %v159 = vsub.f32 %v156, %v158
      %vm160 = vcmask 254976
      %v161 = vsel %vm160, %v159, 0.0
      %162 = vadd.xlane.f32.xlu0 %v161
      %v163 = vpop.xlane.xlu0 %162
      %v164 = vrot.slane %v163, 4
      %v165 = vadd.f32 %v163, %v164
      %v166 = vrot.slane %v165, 2
      %v167 = vadd.f32 %v165, %v166
      %v168 = vrot.slane %v167, 1
      %v169 = vadd.f32 %v167, %v168
      %s170 = vtos %v169
      %s171 = smul.f32 %s170, -0.5
      %p172 = scmp.eq.s32.totalorder 0, 0
      %s173 = scalar_select %p172, %s171, 0.0
      %s174 = sadd.f32 %s151, %s173
      %v175 = vstv %s174
      %vm176 = vcmask 0
      %177 = vst.msk [vmem:[#allocation8] sm:$0x1] %vm176, %v175
    $region41: #{tpu_custom_call.1} parent=1 // pred_fallthru
      _
    // Predicated region
    $region42: #{tpu_custom_call.1} parent=1 // pred_check
      _
    $region43: #{tpu_custom_call.1} parent=1 // pred_check_branch
      %179 = sbr.rel (0) target = $region45
    $region44: #{tpu_custom_call.1} parent=1 // pred_region
      %s181 = ssub.s32 16, 16
      %182 = vsyncadd [#allocation5], %s181
      %s184 = sshll.u32 [#allocation8], 4
      %s185 = int_to_ptr.vmem [resolvable:$true] %s184
      %187 = dma.vmem_to_hbm [thread:$0]  %s185, 16, %s4, [#allocation5]
    $region45: #{tpu_custom_call.1} parent=1 // pred_fallthru
      _
    // Predicated region
    $region46: #{tpu_custom_call.1} parent=1 // pred_check
      _
    $region47: #{tpu_custom_call.1} parent=1 // pred_check_branch
      %189 = sbr.rel (0) target = $region49
    $region48: #{tpu_custom_call.1} parent=1 // pred_region
      %190 = dma.done [#allocation5], 16
    $region49: #{tpu_custom_call.1} parent=1 // pred_fallthru
      _
    %191 = vsyncpa [#allocation4], 1
    %192 = vsyncpa [#allocation7], 1
    %193 = vsyncpa [#allocation5], 1

</llo_original>
